<compile_context>
chip_gen: v6e
topology: v6e:2x2x1
jax: 0.10.0
libtpu: 0.0.40
codegen_flags: <defaults>
</compile_context>

<pallas_src>
import numpy as np

import jax
import jax.numpy as jnp
from jax.experimental import pallas as pl
from jax.experimental.pallas import tpu as pltpu

LANES = 128
_TARGET_BLOCK_BYTES = 2 * 1024 * 1024   # ~2 MiB blocks; 2x(in+out) ~= 8 MiB VMEM


def _round_up(a, m):
    return -(-a // m) * m


def _sublane_multiple(dtype):
    # dtype-aware second-minor tiling: f32 -> 8, bf16/f16 -> 16, int8/fp8 -> 32
    return {4: 8, 2: 16, 1: 32}.get(jnp.dtype(dtype).itemsize, 8)


def _drop_path_kernel(scale_ref, x_ref, o_ref):
    # scale_ref: VMEM (rows, 1) f32 block, value 0.0 (dropped) or 1/keep_prob
    # (kept); broadcasts across the 128-lane axis.  Native-dtype multiply.
    o_ref[...] = x_ref[...] * scale_ref[...].astype(o_ref.dtype)


def drop_path(x, drop_prob, seed, training=True, block_rows=None, donate=False):
    """JAX/Pallas equivalent of DropPath.forward (stochastic depth)."""
    drop_prob = float(drop_prob)
    if drop_prob <= 0.0 or not training:
        return x
    keep_prob = 1.0 - drop_prob

    b = int(x.shape[0])
    l = int(np.prod(x.shape[1:]))
    itemsize = jnp.dtype(x.dtype).itemsize
    sub = _sublane_multiple(x.dtype)

    # Per-batch keep mask -> precomputed scale (0 or 1/keep_prob), hoisted out
    # of the kernel (tiny vector; no in-kernel PRNG needed).
    u = jax.random.uniform(jax.random.PRNGKey(seed), (b,), dtype=jnp.float32)
    scale = (u < jnp.float32(keep_prob)).astype(jnp.float32) * jnp.float32(1.0 / keep_prob)

    cost = pl.CostEstimate(flops=b * l, transcendentals=0,
                           bytes_accessed=2 * b * l * itemsize + 4 * b)
    io_alias = {1: 0} if donate else {}

    if l % LANES == 0:
        # ---- fast path: lane-dense rows, per-row scale, single 1-D grid ----
        r = l // LANES
        R = b * r
        x2 = x.reshape(R, LANES)                          # free metadata reshape
        scale_rows = jnp.repeat(scale, r).reshape(R, 1)   # tiny per-row scale

        if block_rows is not None:
            tile_r = _round_up(int(block_rows), sub)
            if tile_r >= R:
                tile_r = R
        else:
            max_rows = max(sub, (_TARGET_BLOCK_BYTES // (LANES * itemsize)) // sub * sub)
            if R <= 2 * sub:
                tile_r = R                                # single full-extent block
            else:
                # >= 2 grid steps (v7x 2-TC split), blocks capped at ~2 MiB
                tile_r = min(max_rows, _round_up(pl.cdiv(R, 2), sub))

        grid = (pl.cdiv(R, tile_r),)
        out2 = pl.pallas_call(
            _drop_path_kernel,
            out_shape=jax.ShapeDtypeStruct((R, LANES), x.dtype),
            grid=grid,
            in_specs=[
                pl.BlockSpec((tile_r, 1), lambda ri: (ri, 0)),
                pl.BlockSpec((tile_r, LANES), lambda ri: (ri, 0)),
            ],
            out_specs=pl.BlockSpec((tile_r, LANES), lambda ri: (ri, 0)),
            compiler_params=pltpu.CompilerParams(
                dimension_semantics=("parallel",)),
            cost_estimate=cost,
            input_output_aliases=io_alias,
        )(scale_rows, x2)
        return out2.reshape(x.shape)

    # ---- fallback: l not a multiple of 128; keep (b, l), mask the lane tail --
    x2 = x.reshape(b, l)
    scale2 = scale.reshape(b, 1)

    max_tb = max(sub, (_TARGET_BLOCK_BYTES // (LANES * itemsize)) // sub * sub)
    tile_b = b if b <= max_tb else max_tb
    max_tl = max(LANES, (_TARGET_BLOCK_BYTES // (tile_b * itemsize)) // LANES * LANES)
    tile_l = min(_round_up(l, LANES), max_tl)
    grid = (pl.cdiv(b, tile_b), pl.cdiv(l, tile_l))

    out2 = pl.pallas_call(
        _drop_path_kernel,
        out_shape=jax.ShapeDtypeStruct((b, l), x.dtype),
        grid=grid,
        in_specs=[
            pl.BlockSpec((tile_b, 1), lambda bi, li: (bi, 0)),
            pl.BlockSpec((tile_b, tile_l), lambda bi, li: (bi, li)),
        ],
        out_specs=pl.BlockSpec((tile_b, tile_l), lambda bi, li: (bi, li)),
        compiler_params=pltpu.CompilerParams(
            dimension_semantics=("parallel", "parallel")),
        cost_estimate=cost,
        input_output_aliases=io_alias,
    )(scale2, x2)
    return out2.reshape(x.shape)


def _check(x, out, keep_prob, rtol=1e-5, atol=1e-5):
    x_np = np.asarray(x, dtype=np.float32)
    out_np = np.asarray(out, dtype=np.float32)
    for bi in range(x_np.shape[0]):
        scaled = x_np[bi] / keep_prob
        is_kept = np.allclose(out_np[bi], scaled, rtol=rtol, atol=atol)
        is_dropped = np.allclose(out_np[bi], 0.0, atol=atol)
        assert is_kept or is_dropped, f"row {bi} is neither kept nor dropped"


if __name__ == "__main__":
    drop_prob = 0.3
    keep_prob = 1.0 - drop_prob
    key = jax.random.PRNGKey(0)

    # 1) Typical ST_ST usage: (batch, seq, hidden), hidden*seq multiple of 128
    #    -> fast path, single block.
    x = jax.random.normal(key, (2, 8, 32), dtype=jnp.float32)
    out = jax.block_until_ready(drop_path(x, drop_prob, seed=1234, training=True))
    _check(x, out, keep_prob)

    # 2) Multiple row blocks + masked ragged tail (R=64 rows, tile=24 -> grid 3).
    k2 = jax.random.PRNGKey(1)
    x_big = jax.random.normal(k2, (2, 8, 512), dtype=jnp.float32)
    out_big = jax.block_until_ready(
        drop_path(x_big, drop_prob, seed=7, training=True, block_rows=24))
    _check(x_big, out_big, keep_prob)

    # 3) Fallback path: per-sample size (100) not a multiple of 128.
    k3 = jax.random.PRNGKey(2)
    x_odd = jax.random.normal(k3, (2, 5, 20), dtype=jnp.float32)
    out_odd = jax.block_until_ready(drop_path(x_odd, drop_prob, seed=3, training=True))
    _check(x_odd, out_odd, keep_prob)

    # 4) bf16 input: dtype-aware sublane tiling, native-dtype multiply.
    k4 = jax.random.PRNGKey(3)
    x_bf = jax.random.normal(k4, (4, 8, 64), dtype=jnp.bfloat16)
    out_bf = jax.block_until_ready(drop_path(x_bf, drop_prob, seed=11, training=True))
    _check(x_bf, out_bf, keep_prob, rtol=2e-2, atol=2e-2)

    # 5) Eval / drop_prob == 0 are identity.
    out_eval = drop_path(x, drop_prob, seed=1234, training=False)
    assert np.allclose(np.asarray(out_eval), np.asarray(x))
    out_zero = drop_path(x, 0.0, seed=1234, training=True)
    assert np.allclose(np.asarray(out_zero), np.asarray(x))

    print("KERNEL_OK")
</pallas_src>

<mosaic_0001>
module attributes {stable_mosaic.version = 11 : i64} {
  func.func @_drop_path_kernel(%arg0: i32, %arg1: memref<4x1xf32, #tpu.memory_space<vmem>>, %arg2: memref<4x128xf32, #tpu.memory_space<vmem>>, %arg3: memref<4x128xf32, #tpu.memory_space<vmem>>) attributes {dimension_semantics = [#tpu.dimension_semantics<parallel>], iteration_bounds = array<i64: 1>, scalar_prefetch = 0 : i64, scratch_operands = 0 : i64, tpu.core_type = #tpu.core_type<tc>, window_params = [{transform_indices = @transform_0, window_bounds = array<i64: 4, 1>}, {transform_indices = @transform_1, window_bounds = array<i64: 4, 128>}, {transform_indices = @transform_2, window_bounds = array<i64: 4, 128>}]} {
    %c0 = arith.constant 0 : index
    %c0_0 = arith.constant 0 : index
    %0 = vector.load %arg2[%c0, %c0_0] : memref<4x128xf32, #tpu.memory_space<vmem>>, vector<4x128xf32>
    %c0_1 = arith.constant 0 : index
    %c0_2 = arith.constant 0 : index
    %1 = vector.load %arg1[%c0_1, %c0_2] : memref<4x1xf32, #tpu.memory_space<vmem>>, vector<4x1xf32>
    %2 = vector.broadcast %1 : vector<4x1xf32> to vector<4x128xf32>
    %3 = arith.mulf %0, %2 : vector<4x128xf32>
    %c0_3 = arith.constant 0 : index
    %c0_4 = arith.constant 0 : index
    %4 = vector.load %arg3[%c0_3, %c0_4] : memref<4x128xf32, #tpu.memory_space<vmem>>, vector<4x128xf32>
    tpu.vector_store %arg3[%c0_3, %c0_4], %3 {strides = array<i32>} : memref<4x128xf32, #tpu.memory_space<vmem>>, vector<4x128xf32>,
    return
  }
  func.func @transform_0(%arg0: i32) -> (i32, i32) {
    %c0_i32 = arith.constant 0 : i32
    %c0_i32_0 = arith.constant 0 : i32
    return %arg0, %c0_i32 : i32, i32
  }
  func.func @transform_1(%arg0: i32) -> (i32, i32) {
    %c0_i32 = arith.constant 0 : i32
    %c0_i32_0 = arith.constant 0 : i32
    return %arg0, %c0_i32 : i32, i32
  }
  func.func @transform_2(%arg0: i32) -> (i32, i32) {
    %c0_i32 = arith.constant 0 : i32
    %c0_i32_0 = arith.constant 0 : i32
    return %arg0, %c0_i32 : i32, i32
  }
}

</mosaic_0001>

<llo_original>
// kernel: tpu_custom_call.1
$region0: #{tpu_custom_call.1}
  #allocation0 [shape = 'u32[]', space=smem, size = 0x4, offset = 0x4, fixed_abs, tag = 'smem constant byte address 0x4 - core index']
  #allocation1 [shape = 'u32[144,128]{1,0:T(1,128)}', space=vmem, size = 0x12000, scoped, tag = 'internal scratch']
  %s0 = inlined_call_operand.vmem [shape: f32[4,1], index: 0, kind: input, shape index: {}]
  %s1 = inlined_call_operand.vmem [shape: f32[4,128], index: 1, kind: input, shape index: {}]
  %s2 = inlined_call_operand.hbm [shape: f32[4,128], index: 2, kind: output, shape index: {}]
  %s3 = sld [smem:[#allocation0]]
  $region18: #{tpu_custom_call.1} parent=0
    _
  %s5 = ssub.s32 1, %s3
  %s6 = scalar_select 0, %s5, %s3
  $region1: #{tpu_custom_call.1} parent=0
    #allocation2 [shape = 'u8[2048]{0}', space=vmem, size = 0x800, scoped, tag = 'output window, operand 0, single buffered']
    #allocation3 [shape = 's32[1]{0}', space=sflag, size = 0x4, scoped, tag = 'scoped memory for tpu_custom_call.1']
    %7 = vsyncpa [#allocation3], 0
    // Predicated region
    $region2: #{tpu_custom_call.1} parent=1 // pred_check
      _
    $region3: #{tpu_custom_call.1} parent=1 // pred_check_branch
      %9 = sbr.rel (0) target = $region5
    $region4: #{tpu_custom_call.1} parent=1 // pred_region
      _
    $region5: #{tpu_custom_call.1} parent=1 // pred_fallthru
      _
    // Predicated region
    $region6: #{tpu_custom_call.1} parent=1 // pred_check
      _
    $region7: #{tpu_custom_call.1} parent=1 // pred_check_branch
      %11 = sbr.rel (0) target = $region9
    $region8: #{tpu_custom_call.1} parent=1 // pred_region
      _
    $region9: #{tpu_custom_call.1} parent=1 // pred_fallthru
      _
    %v12 = vld [vmem:[%s1] sm:$0xf]
    %v13 = vld [vmem:[%s0] sm:$0xf]
    %15 = vset.pattern.permute.xlu0 0
    %16 = vperm.xlu0 %15, %v13
    %v17 = vpop.permute.xlu0 %16
    %v19 = vmul.f32 %v12, %v17
    %20 = vst [vmem:[#allocation2] sm:$0xf] %v19
    // Predicated region
    $region10: #{tpu_custom_call.1} parent=1 // pred_check
      _
    $region11: #{tpu_custom_call.1} parent=1 // pred_check_branch
      %22 = sbr.rel (0) target = $region13
    $region12: #{tpu_custom_call.1} parent=1 // pred_region
      %s24 = ssub.s32 64, 64
      %25 = vsyncadd [#allocation3], %s24
      %s27 = sshll.u32 [#allocation2], 4
      %s28 = int_to_ptr.vmem [resolvable:$true] %s27
      %30 = dma.vmem_to_hbm [thread:$0]  %s28, 64, %s2, [#allocation3]
    $region13: #{tpu_custom_call.1} parent=1 // pred_fallthru
      _
    // Predicated region
    $region14: #{tpu_custom_call.1} parent=1 // pred_check
      _
    $region15: #{tpu_custom_call.1} parent=1 // pred_check_branch
      %32 = sbr.rel (0) target = $region17
    $region16: #{tpu_custom_call.1} parent=1 // pred_region
      %33 = dma.done [#allocation3], 64
    $region17: #{tpu_custom_call.1} parent=1 // pred_fallthru
      _
    %34 = vsyncpa [#allocation3], 1

</llo_original>
